<compile_context>
chip_gen: v5e
topology: v5e:2x2
jax: 0.10.0
libtpu: 0.0.40
codegen_flags: <defaults>
</compile_context>

<pallas_src>
import jax
import jax.numpy as jnp
from jax.experimental import pallas as pl
from jax.experimental.pallas import tpu as pltpu

_SUBLANE = 8
_LANE = 128


# ----------------------------------------------------------------------------
# Kernel: one (row-tile, F-chunk) step of
#     acc += relu(x @ W1[:, f_blk] + b1[f_blk]) @ W2[f_blk, :]
# with bias-2 add + dtype cast on the last F-chunk.
# ----------------------------------------------------------------------------
def _ffn_kernel(x_ref, w1_ref, b1_ref, w2_ref, b2_ref, o_ref, acc_ref):
    f = pl.program_id(1)

    @pl.when(f == 0)
    def _():
        acc_ref[...] = jnp.zeros_like(acc_ref)

    # Cast activations to the weights' dtype (bf16 by default) for the MXU;
    # accumulate in f32.  Bias + ReLU stay in f32 on the VPU.
    x = x_ref[...].astype(w1_ref.dtype)
    h = jnp.dot(x, w1_ref[...], preferred_element_type=jnp.float32)
    h = jnp.maximum(h + b1_ref[...], 0.0)            # ReLU (dropout = identity)
    acc_ref[...] += jnp.dot(h.astype(w2_ref.dtype), w2_ref[...],
                            preferred_element_type=jnp.float32)

    @pl.when(f == pl.num_programs(1) - 1)
    def _():
        o_ref[...] = (acc_ref[...] + b2_ref[...]).astype(o_ref.dtype)


# ----------------------------------------------------------------------------
# Tiling helpers
# ----------------------------------------------------------------------------
def _cdiv(a, b):
    return -(-a // b)


def _round_up(x, m):
    return _cdiv(x, m) * m


def _choose_tiles(M, E, F, x_bytes, out_bytes, w_bytes, budget):
    """Pick (tile_m, tile_f) so everything fits `budget` bytes of VMEM.

    Accounts for: 2x double-buffered x tile, 2x double-buffered out tile,
    f32 accumulator scratch, 2x-buffered W1/W2/b1 chunks, b2, and the f32
    hidden temp (tile_m x tile_f).
    """
    M8 = max(_round_up(M, _SUBLANE), _SUBLANE)

    def fixed_bytes(tm):
        return tm * E * (2 * x_bytes + 2 * out_bytes + 4) + 2 * E * 4

    def weight_bytes(tf, tm):
        return 2 * (2 * E * tf * w_bytes + tf * 4) + tm * tf * 4

    tile_m_cap = 512                      # ~85% of HBM roofline per tile sweep
    while True:
        n_m = _cdiv(M8, tile_m_cap)
        if M8 >= 2 * _LANE:
            n_m = max(n_m, 2)             # let v7x shard the parallel M axis
        tile_m = _round_up(_cdiv(M8, n_m), _SUBLANE)
        if fixed_bytes(tile_m) + weight_bytes(min(F, _LANE), tile_m) <= budget:
            break
        if tile_m_cap <= _SUBLANE:
            break                         # smallest possible tile; give up
        tile_m_cap //= 2

    if fixed_bytes(tile_m) + weight_bytes(F, tile_m) <= budget:
        tile_f = F                        # both weight matrices fully resident
    else:
        tile_f = _LANE                    # stream W1/W2 in 128-wide F chunks
        while (tile_f + _LANE <= F and
               fixed_bytes(tile_m) + weight_bytes(tile_f + _LANE, tile_m) <= budget):
            tile_f += _LANE
    return tile_m, tile_f


# ----------------------------------------------------------------------------
# Wrapper
# ----------------------------------------------------------------------------
def feed_forward_pallas(x, w1, b1, w2, b2, *, matmul_dtype=jnp.bfloat16,
                        vmem_budget_bytes=None):
    """FeedForwardBlock forward (eval mode).

    x : [..., E] array (any float dtype; output matches it).
    w1: [E, F]  (== torch linear_1.weight.T),  b1: [F]
    w2: [F, E]  (== torch linear_2.weight.T),  b2: [E]
    matmul_dtype: dtype fed to the MXU (bf16 default; jnp.float32 for exactness).
    """
    E, F = w1.shape
    assert w2.shape == (F, E)
    orig_shape = x.shape
    out_dtype = x.dtype
    x2d = x.reshape(-1, E)                # keep the caller's dtype (no up-cast)
    M = x2d.shape[0]

    x_bytes = jnp.dtype(x.dtype).itemsize
    out_bytes = x_bytes
    w_bytes = jnp.dtype(matmul_dtype).itemsize

    # VMEM budget / limit from the actual chip (v5e/v6e 128 MiB, v7x 64 MiB).
    try:
        vmem_cap = int(pltpu.get_tpu_info().vmem_capacity_bytes)
    except Exception:
        vmem_cap = 64 << 20               # v7x per-TC size (smallest) as fallback
    vmem_limit = min((vmem_cap * 3) // 4, 96 << 20)
    if vmem_budget_bytes is None:
        vmem_budget_bytes = (vmem_limit * 3) // 4   # headroom inside the limit

    tile_m, tile_f = _choose_tiles(M, E, F, x_bytes, out_bytes, w_bytes,
                                   vmem_budget_bytes)
    n_m = _cdiv(M, tile_m)
    M_pad = n_m * tile_m
    n_f = _cdiv(F, tile_f)
    F_pad = n_f * tile_f

    if M_pad != M:                        # only pad when actually needed
        x2d = jnp.pad(x2d, ((0, M_pad - M), (0, 0)))

    w1c = w1.astype(matmul_dtype)
    w2c = w2.astype(matmul_dtype)
    b1c = b1.astype(jnp.float32).reshape(1, F)
    b2c = b2.astype(jnp.float32).reshape(1, E)
    if F_pad != F:                        # zero-pad F: contributes exactly 0
        w1c = jnp.pad(w1c, ((0, 0), (0, F_pad - F)))
        b1c = jnp.pad(b1c, ((0, 0), (0, F_pad - F)))
        w2c = jnp.pad(w2c, ((0, F_pad - F), (0, 0)))

    cost = pl.CostEstimate(
        flops=4 * M * E * F,              # two M*E*F matmuls, 2 flops / MAC
        transcendentals=0,
        bytes_accessed=(M * E * (x_bytes + out_bytes)
                        + 2 * E * F * w_bytes + (E + F) * 4),
    )

    out = pl.pallas_call(
        _ffn_kernel,
        out_shape=jax.ShapeDtypeStruct((M_pad, E), out_dtype),
        grid=(n_m, n_f),
        in_specs=[
            pl.BlockSpec((tile_m, E), lambda i, f: (i, 0)),   # x row tile
            pl.BlockSpec((E, tile_f), lambda i, f: (0, f)),   # W1 F-chunk
            pl.BlockSpec((1, tile_f), lambda i, f: (0, f)),   # b1 F-chunk
            pl.BlockSpec((tile_f, E), lambda i, f: (f, 0)),   # W2 F-chunk
            pl.BlockSpec((1, E), lambda i, f: (0, 0)),        # b2 resident
        ],
        out_specs=pl.BlockSpec((tile_m, E), lambda i, f: (i, 0)),
        scratch_shapes=[pltpu.VMEM((tile_m, E), jnp.float32)],  # f32 accumulator
        compiler_params=pltpu.CompilerParams(
            dimension_semantics=("parallel", "arbitrary"),
            vmem_limit_bytes=vmem_limit,
        ),
        cost_estimate=cost,
    )(x2d, w1c, b1c, w2c, b2c)

    if M_pad != M:
        out = out[:M]
    return out.reshape(orig_shape)


# ----------------------------------------------------------------------------
# Pure-JAX f32 reference (same math as the PyTorch module in eval mode)
# ----------------------------------------------------------------------------
def feed_forward_ref(x, w1, b1, w2, b2):
    h = jnp.maximum(x @ w1 + b1, 0.0)
    return h @ w2 + b2


def _xavier_uniform(key, shape):
    bound = (6.0 / (shape[0] + shape[1])) ** 0.5
    return jax.random.uniform(key, shape, jnp.float32, -bound, bound)


# TODO(synk): train-mode dropout (stochastic masking) is not implemented; the
# kernel matches the module in eval mode where nn.Dropout is the identity.

if __name__ == "__main__":
    B, S, E, F = 2, 8, 128, 256           # lane-dense E/F (multiples of 128)

    key = jax.random.PRNGKey(0)
    k_x, k_w1, k_b1, k_w2, k_b2, k_x2, k_x3 = jax.random.split(key, 7)

    x = jax.random.normal(k_x, (B, S, E), jnp.float32)
    w1 = _xavier_uniform(k_w1, (E, F))
    b1 = 0.01 * jax.random.normal(k_b1, (F,), jnp.float32)
    w2 = _xavier_uniform(k_w2, (F, E))
    b2 = 0.01 * jax.random.normal(k_b2, (E,), jnp.float32)

    def check(out, ref, tol, name):
        assert out.shape == ref.shape, name
        assert bool(jnp.all(jnp.isfinite(out))), name
        denom = float(jnp.maximum(jnp.max(jnp.abs(ref)), 1.0))
        rel = float(jnp.max(jnp.abs(out.astype(jnp.float32) - ref))) / denom
        assert rel < tol, f"{name}: rel_err={rel}"

    # 1) small f32 input: single row tile, weights fully resident.
    out = jax.block_until_ready(feed_forward_pallas(x, w1, b1, w2, b2))
    check(out, feed_forward_ref(x, w1, b1, w2, b2), 5e-2, "small f32")

    # 2) bf16 activations: kernel input/output stay bf16 (half the HBM bytes).
    xb = x.astype(jnp.bfloat16)
    outb = jax.block_until_ready(feed_forward_pallas(xb, w1, b1, w2, b2))
    assert outb.dtype == jnp.bfloat16
    check(outb, feed_forward_ref(xb.astype(jnp.float32), w1, b1, w2, b2),
          5e-2, "bf16 activations")

    # 3) M = 1200: padding-free 3 x 400 row tiles, grid = (3, 1).
    x_big = jax.random.normal(k_x2, (4, 300, E), jnp.float32)
    out_big = jax.block_until_ready(feed_forward_pallas(x_big, w1, b1, w2, b2))
    check(out_big, feed_forward_ref(x_big, w1, b1, w2, b2), 5e-2, "big M")

    # 4) ragged M = 21: exercises the (minimal) row-padding path.
    x_rag = jax.random.normal(k_x3, (3, 7, E), jnp.float32)
    out_rag = jax.block_until_ready(feed_forward_pallas(x_rag, w1, b1, w2, b2))
    check(out_rag, feed_forward_ref(x_rag, w1, b1, w2, b2), 5e-2, "ragged M")

    # 5) tiny VMEM budget forces the F-streaming accumulator path (grid=(1,2)).
    out_s = jax.block_until_ready(
        feed_forward_pallas(x, w1, b1, w2, b2, vmem_budget_bytes=256 * 1024))
    check(out_s, feed_forward_ref(x, w1, b1, w2, b2), 5e-2, "F-streamed")

    print("KERNEL_OK")
</pallas_src>

<mosaic_0001>
module attributes {stable_mosaic.version = 11 : i64} {
  func.func @_ffn_kernel(%arg0: i32, %arg1: i32, %arg2: memref<16x128xf32, #tpu.memory_space<vmem>>, %arg3: memref<128x256xbf16, #tpu.memory_space<vmem>>, %arg4: memref<1x256xf32, #tpu.memory_space<vmem>>, %arg5: memref<256x128xbf16, #tpu.memory_space<vmem>>, %arg6: memref<1x128xf32, #tpu.memory_space<vmem>>, %arg7: memref<16x128xf32, #tpu.memory_space<vmem>>, %arg8: memref<16x128xf32, #tpu.memory_space<vmem>>) attributes {dimension_semantics = [#tpu.dimension_semantics<parallel>, #tpu.dimension_semantics<arbitrary>], iteration_bounds = array<i64: 1, 1>, scalar_prefetch = 0 : i64, scratch_operands = 1 : i64, tpu.core_type = #tpu.core_type<tc>, window_params = [{transform_indices = @transform_0, window_bounds = array<i64: 16, 128>}, {transform_indices = @transform_1, window_bounds = array<i64: 128, 256>}, {transform_indices = @transform_2, window_bounds = array<i64: 1, 256>}, {transform_indices = @transform_3, window_bounds = array<i64: 256, 128>}, {pipeline_mode = #tpu.pipeline_mode<synchronous>, transform_indices = @transform_4, window_bounds = array<i64: 1, 128>}, {transform_indices = @transform_5, window_bounds = array<i64: 16, 128>}]} {
    %c0_i32 = arith.constant 0 : i32
    %0 = arith.cmpi eq, %arg1, %c0_i32 : i32
    %1 = arith.extui %0 : i1 to i32
    %c0_i32_0 = arith.constant 0 : i32
    %2 = arith.cmpi ne, %1, %c0_i32_0 : i32
    scf.if %2 {
      %cst_16 = arith.constant 0.000000e+00 : f32
      %21 = vector.broadcast %cst_16 : f32 to vector<16x128xf32>
      %c0_17 = arith.constant 0 : index
      %c0_18 = arith.constant 0 : index
      %22 = vector.load %arg8[%c0_17, %c0_18] : memref<16x128xf32, #tpu.memory_space<vmem>>, vector<16x128xf32>
      tpu.vector_store %arg8[%c0_17, %c0_18], %21 {strides = array<i32>} : memref<16x128xf32, #tpu.memory_space<vmem>>, vector<16x128xf32>,
    } else {
    }
    %c0 = arith.constant 0 : index
    %c0_1 = arith.constant 0 : index
    %3 = vector.load %arg2[%c0, %c0_1] : memref<16x128xf32, #tpu.memory_space<vmem>>, vector<16x128xf32>
    %4 = arith.truncf %3 : vector<16x128xf32> to vector<16x128xbf16>
    %c0_2 = arith.constant 0 : index
    %c0_3 = arith.constant 0 : index
    %5 = vector.load %arg3[%c0_2, %c0_3] : memref<128x256xbf16, #tpu.memory_space<vmem>>, vector<128x256xbf16>
    %cst = arith.constant dense<0.000000e+00> : vector<16x256xf32>
    %6 = tpu.matmul %4, %5, %cst {dimension_numbers = #tpu.dot_dimension_numbers<[1], [0], [0], [1], [0, 0, 1, 1], [], []>} : vector<16x128xbf16>, vector<128x256xbf16>, vector<16x256xf32> -> vector<16x256xf32>
    %c0_4 = arith.constant 0 : index
    %c0_5 = arith.constant 0 : index
    %7 = vector.load %arg4[%c0_4, %c0_5] : memref<1x256xf32, #tpu.memory_space<vmem>>, vector<1x256xf32>
    %8 = vector.broadcast %7 : vector<1x256xf32> to vector<16x256xf32>
    %9 = arith.addf %6, %8 : vector<16x256xf32>
    %cst_6 = arith.constant 0.000000e+00 : f32
    %10 = vector.broadcast %cst_6 : f32 to vector<16x256xf32>
    %11 = arith.maximumf %9, %10 : vector<16x256xf32>
    %c0_7 = arith.constant 0 : index
    %c0_8 = arith.constant 0 : index
    %12 = vector.load %arg8[%c0_7, %c0_8] : memref<16x128xf32, #tpu.memory_space<vmem>>, vector<16x128xf32>
    %13 = arith.truncf %11 : vector<16x256xf32> to vector<16x256xbf16>
    %c0_9 = arith.constant 0 : index
    %c0_10 = arith.constant 0 : index
    %14 = vector.load %arg5[%c0_9, %c0_10] : memref<256x128xbf16, #tpu.memory_space<vmem>>, vector<256x128xbf16>
    %cst_11 = arith.constant dense<0.000000e+00> : vector<16x128xf32>
    %15 = tpu.matmul %13, %14, %cst_11 {dimension_numbers = #tpu.dot_dimension_numbers<[1], [0], [0], [1], [0, 0, 1, 1], [], []>} : vector<16x256xbf16>, vector<256x128xbf16>, vector<16x128xf32> -> vector<16x128xf32>
    %16 = arith.addf %12, %15 : vector<16x128xf32>
    %c0_12 = arith.constant 0 : index
    %c0_13 = arith.constant 0 : index
    %17 = vector.load %arg8[%c0_12, %c0_13] : memref<16x128xf32, #tpu.memory_space<vmem>>, vector<16x128xf32>
    tpu.vector_store %arg8[%c0_12, %c0_13], %16 {strides = array<i32>} : memref<16x128xf32, #tpu.memory_space<vmem>>, vector<16x128xf32>,
    %c0_i32_14 = arith.constant 0 : i32
    %18 = arith.cmpi eq, %arg1, %c0_i32_14 : i32
    %19 = arith.extui %18 : i1 to i32
    %c0_i32_15 = arith.constant 0 : i32
    %20 = arith.cmpi ne, %19, %c0_i32_15 : i32
    scf.if %20 {
      %c0_16 = arith.constant 0 : index
      %c0_17 = arith.constant 0 : index
      %21 = vector.load %arg8[%c0_16, %c0_17] : memref<16x128xf32, #tpu.memory_space<vmem>>, vector<16x128xf32>
      %c0_18 = arith.constant 0 : index
      %c0_19 = arith.constant 0 : index
      %22 = vector.load %arg6[%c0_18, %c0_19] : memref<1x128xf32, #tpu.memory_space<vmem>>, vector<1x128xf32>
      %23 = vector.broadcast %22 : vector<1x128xf32> to vector<16x128xf32>
      %24 = arith.addf %21, %23 : vector<16x128xf32>
      %c0_20 = arith.constant 0 : index
      %c0_21 = arith.constant 0 : index
      %25 = vector.load %arg7[%c0_20, %c0_21] : memref<16x128xf32, #tpu.memory_space<vmem>>, vector<16x128xf32>
      tpu.vector_store %arg7[%c0_20, %c0_21], %24 {strides = array<i32>} : memref<16x128xf32, #tpu.memory_space<vmem>>, vector<16x128xf32>,
    } else {
    }
    return
  }
  func.func @transform_0(%arg0: i32, %arg1: i32) -> (i32, i32) {
    %c0_i32 = arith.constant 0 : i32
    %c0_i32_0 = arith.constant 0 : i32
    return %arg0, %c0_i32 : i32, i32
  }
  func.func @transform_1(%arg0: i32, %arg1: i32) -> (i32, i32) {
    %c0_i32 = arith.constant 0 : i32
    %c0_i32_0 = arith.constant 0 : i32
    return %c0_i32, %arg1 : i32, i32
  }
  func.func @transform_2(%arg0: i32, %arg1: i32) -> (i32, i32) {
    %c0_i32 = arith.constant 0 : i32
    %c0_i32_0 = arith.constant 0 : i32
    return %c0_i32, %arg1 : i32, i32
  }
  func.func @transform_3(%arg0: i32, %arg1: i32) -> (i32, i32) {
    %c0_i32 = arith.constant 0 : i32
    %c0_i32_0 = arith.constant 0 : i32
    return %arg1, %c0_i32 : i32, i32
  }
  func.func @transform_4(%arg0: i32, %arg1: i32) -> (i32, i32) {
    %c0_i32 = arith.constant 0 : i32
    %c0_i32_0 = arith.constant 0 : i32
    %c0_i32_1 = arith.constant 0 : i32
    return %c0_i32, %c0_i32_0 : i32, i32
  }
  func.func @transform_5(%arg0: i32, %arg1: i32) -> (i32, i32) {
    %c0_i32 = arith.constant 0 : i32
    %c0_i32_0 = arith.constant 0 : i32
    return %arg0, %c0_i32 : i32, i32
  }
}

</mosaic_0001>

<llo_original>
// kernel: tpu_custom_call.1
$region0: #{tpu_custom_call.1}
  #allocation0 [shape = 'u32[]', space=smem, size = 0x4, offset = 0x4, fixed_abs, tag = 'smem constant byte address 0x4 - core index']
  #allocation1 [shape = 'u32[72,128]{1,0:T(1,128)}', space=vmem, size = 0x9000, scoped, tag = 'internal scratch']
  #allocation2 [shape = 'f32[16,128]{1,0:T(8,128)}', space=vmem, size = 0x2000, scoped, tag = 'scratch operand']
  %s0 = inlined_call_operand.hbm [shape: f32[16,128], index: 0, kind: input, shape index: {}]
  %s1 = inlined_call_operand.hbm [shape: bf16[128,256], index: 1, kind: input, shape index: {}]
  %s2 = inlined_call_operand.hbm [shape: f32[1,256], index: 2, kind: input, shape index: {}]
  %s3 = inlined_call_operand.hbm [shape: bf16[256,128], index: 3, kind: input, shape index: {}]
  %s4 = inlined_call_operand.vmem [shape: f32[1,128], index: 4, kind: input, shape index: {}]
  %s5 = inlined_call_operand.hbm [shape: f32[16,128], index: 5, kind: output, shape index: {}]
  %s6 = sld [smem:[#allocation0]]
  $region54: #{tpu_custom_call.1} parent=0
    _
  %s8 = ssub.s32 1, %s6
  %s9 = scalar_select 0, %s8, %s6
  $region1: #{tpu_custom_call.1} parent=0
    #allocation3 [shape = 'u8[8192]{0}', space=vmem, size = 0x2000, scoped, tag = 'input window, operand 0, single buffered']
    #allocation4 [shape = 's32[1]{0}', space=sflag, size = 0x4, scoped, tag = 'scoped memory for tpu_custom_call.1']
    #allocation5 [shape = 's32[1]{0}', space=sflag, size = 0x4, scoped, tag = 'scoped memory for tpu_custom_call.1']
    #allocation6 [shape = 'u8[65536]{0}', space=vmem, size = 0x10000, scoped, tag = 'input window, operand 1, single buffered']
    #allocation7 [shape = 's32[1]{0}', space=sflag, size = 0x4, scoped, tag = 'scoped memory for tpu_custom_call.1']
    #allocation8 [shape = 'u8[1024]{0}', space=vmem, size = 0x400, scoped, tag = 'input window, operand 2, single buffered']
    #allocation9 [shape = 'u8[65536]{0}', space=vmem, size = 0x10000, scoped, tag = 'input window, operand 3, single buffered']
    #allocation10 [shape = 's32[1]{0}', space=sflag, size = 0x4, scoped, tag = 'scoped memory for tpu_custom_call.1']
    #allocation11 [shape = 'u8[8192]{0}', space=vmem, size = 0x2000, scoped, tag = 'output window, operand 0, single buffered']
    %10 = vsyncpa [#allocation4], 0
    %11 = vsyncpa [#allocation7], 0
    %12 = vsyncpa [#allocation10], 0
    %13 = vsyncpa [#allocation5], 0
    // Predicated region
    $region2: #{tpu_custom_call.1} parent=1 // pred_check
      _
    $region3: #{tpu_custom_call.1} parent=1 // pred_check_branch
      %15 = sbr.rel (0) target = $region5
    $region4: #{tpu_custom_call.1} parent=1 // pred_region
      %17 = vsyncadd [#allocation4], 0
      %s18 = sshll.u32 %s0, 4
      %s19 = int_to_ptr.hbm [resolvable:$true] %s18
      %s20 = sshll.u32 [#allocation3], 4
      %s21 = int_to_ptr.vmem [resolvable:$true] %s20
      %26 = dma.hbm_to_vmem [thread:$0]  %s19, 256, %s21, [#allocation4], 128, 128, 8
    $region5: #{tpu_custom_call.1} parent=1 // pred_fallthru
      _
    // Predicated region
    $region6: #{tpu_custom_call.1} parent=1 // pred_check
      _
    $region7: #{tpu_custom_call.1} parent=1 // pred_check_branch
      %28 = sbr.rel (0) target = $region9
    $region8: #{tpu_custom_call.1} parent=1 // pred_region
      %30 = vsyncadd [#allocation7], 0
      %s31 = sshll.u32 %s1, 4
      %s32 = int_to_ptr.hbm [resolvable:$true] %s31
      %s33 = sshll.u32 [#allocation6], 4
      %s34 = int_to_ptr.vmem [resolvable:$true] %s33
      %39 = dma.hbm_to_vmem [thread:$0]  %s32, 2048, %s34, [#allocation7], 128, 128, 8
    $region9: #{tpu_custom_call.1} parent=1 // pred_fallthru
      _
    // Predicated region
    $region10: #{tpu_custom_call.1} parent=1 // pred_check
      _
    $region11: #{tpu_custom_call.1} parent=1 // pred_check_branch
      %41 = sbr.rel (0) target = $region13
    $region12: #{tpu_custom_call.1} parent=1 // pred_region
      %43 = vsyncadd [#allocation7], 0
      %s45 = sshll.u32 %s2, 4
      %s46 = int_to_ptr.hbm [resolvable:$true] %s45
      %s47 = sshll.u32 [#allocation8], 4
      %s48 = int_to_ptr.vmem [resolvable:$true] %s47
      %50 = dma.hbm_to_vmem [thread:$0]  %s46, 32, %s48, [#allocation7]
    $region13: #{tpu_custom_call.1} parent=1 // pred_fallthru
      _
    // Predicated region
    $region14: #{tpu_custom_call.1} parent=1 // pred_check
      _
    $region15: #{tpu_custom_call.1} parent=1 // pred_check_branch
      %52 = sbr.rel (0) target = $region17
    $region16: #{tpu_custom_call.1} parent=1 // pred_region
      %54 = vsyncadd [#allocation10], 0
      %s55 = sshll.u32 %s3, 4
      %s56 = int_to_ptr.hbm [resolvable:$true] %s55
      %s57 = sshll.u32 [#allocation9], 4
      %s58 = int_to_ptr.vmem [resolvable:$true] %s57
      %63 = dma.hbm_to_vmem [thread:$0]  %s56, 2048, %s58, [#allocation10], 64, 64, 4
    $region17: #{tpu_custom_call.1} parent=1 // pred_fallthru
      _
    // Predicated region
    $region18: #{tpu_custom_call.1} parent=1 // pred_check
      _
    $region19: #{tpu_custom_call.1} parent=1 // pred_check_branch
      %65 = sbr.rel (0) target = $region21
    $region20: #{tpu_custom_call.1} parent=1 // pred_region
      _
    $region21: #{tpu_custom_call.1} parent=1 // pred_fallthru
      _
    // Predicated region
    $region22: #{tpu_custom_call.1} parent=1 // pred_check
      _
    $region23: #{tpu_custom_call.1} parent=1 // pred_check_branch
      %67 = sbr.rel (0) target = $region25
    $region24: #{tpu_custom_call.1} parent=1 // pred_region
      %69 = dma.done [#allocation4], 256
    $region25: #{tpu_custom_call.1} parent=1 // pred_fallthru
      _
    // Predicated region
    $region26: #{tpu_custom_call.1} parent=1 // pred_check
      _
    $region27: #{tpu_custom_call.1} parent=1 // pred_check_branch
      %71 = sbr.rel (0) target = $region29
    $region28: #{tpu_custom_call.1} parent=1 // pred_region
      %73 = dma.done [#allocation7], 2048
    $region29: #{tpu_custom_call.1} parent=1 // pred_fallthru
      _
    // Predicated region
    $region30: #{tpu_custom_call.1} parent=1 // pred_check
      _
    $region31: #{tpu_custom_call.1} parent=1 // pred_check_branch
      %75 = sbr.rel (0) target = $region33
    $region32: #{tpu_custom_call.1} parent=1 // pred_region
      %77 = dma.done [#allocation7], 32
    $region33: #{tpu_custom_call.1} parent=1 // pred_fallthru
      _
    // Predicated region
    $region34: #{tpu_custom_call.1} parent=1 // pred_check
      _
    $region35: #{tpu_custom_call.1} parent=1 // pred_check_branch
      %79 = sbr.rel (0) target = $region37
    $region36: #{tpu_custom_call.1} parent=1 // pred_region
      %81 = dma.done [#allocation10], 2048
    $region37: #{tpu_custom_call.1} parent=1 // pred_fallthru
      _
    %p82 = scmp.eq.s32.totalorder 0, 0
    // Predicated region
    $region38: #{tpu_custom_call.1} parent=1 // pred_check
      %p83 = pneg %p82
    $region39: #{tpu_custom_call.1} parent=1 // pred_check_branch
      %85 = sbr.rel (%p83) target = $region41
    $region40: #{tpu_custom_call.1} parent=1 // pred_region
      %86 = vst [vmem:[#allocation2] sm:$0xff] 0.0
      %87 = vst [vmem:[#allocation2 + $0x8] sm:$0xff] 0.0
    $region41: #{tpu_custom_call.1} parent=1 // pred_fallthru
      _
    %v88 = vld [vmem:[#allocation3] sm:$0xff]
    %v89 = vld [vmem:[#allocation3 + $0x8] sm:$0xff]
    %v90 = vpack.c.bf16 %v89, %v88
    %v91 = vld [vmem:[#allocation6] sm:$0xff]
    %v92 = vld [vmem:[#allocation6 + $0x8] sm:$0xff]
    %v93 = vld [vmem:[#allocation6 + $0x10] sm:$0xff]
    %v94 = vld [vmem:[#allocation6 + $0x18] sm:$0xff]
    %v95 = vld [vmem:[#allocation6 + $0x20] sm:$0xff]
    %v96 = vld [vmem:[#allocation6 + $0x28] sm:$0xff]
    %v97 = vld [vmem:[#allocation6 + $0x30] sm:$0xff]
    %v98 = vld [vmem:[#allocation6 + $0x38] sm:$0xff]
    %v99 = vld [vmem:[#allocation6 + $0x40] sm:$0xff]
    %v100 = vld [vmem:[#allocation6 + $0x48] sm:$0xff]
    %v101 = vld [vmem:[#allocation6 + $0x50] sm:$0xff]
    %v102 = vld [vmem:[#allocation6 + $0x58] sm:$0xff]
    %v103 = vld [vmem:[#allocation6 + $0x60] sm:$0xff]
    %v104 = vld [vmem:[#allocation6 + $0x68] sm:$0xff]
    %v105 = vld [vmem:[#allocation6 + $0x70] sm:$0xff]
    %v106 = vld [vmem:[#allocation6 + $0x78] sm:$0xff]
    %v107 = vld [vmem:[#allocation8] sm:$0x3]
    %v109 = vperm.slane %v107, 0
    %v110 = vperm.slane %v107, 1
    %v129 = vunpack.c.l.b16 %v91
    %v130 = vunpack.c.h.b16 %v91
    %v131 = vunpack.c.l.b16 %v92
    %v132 = vunpack.c.h.b16 %v92
    %v133 = vunpack.c.l.b16 %v93
    %v134 = vunpack.c.h.b16 %v93
    %v135 = vunpack.c.l.b16 %v94
    %v136 = vunpack.c.h.b16 %v94
    %v137 = vunpack.c.l.b16 %v95
    %v138 = vunpack.c.h.b16 %v95
    %v139 = vunpack.c.l.b16 %v96
    %v140 = vunpack.c.h.b16 %v96
    %v141 = vunpack.c.l.b16 %v97
    %v142 = vunpack.c.h.b16 %v97
    %v143 = vunpack.c.l.b16 %v98
    %v144 = vunpack.c.h.b16 %v98
    %v145 = vunpack.c.l.b16 %v99
    %v146 = vunpack.c.h.b16 %v99
    %v147 = vunpack.c.l.b16 %v100
    %v148 = vunpack.c.h.b16 %v100
    %v149 = vunpack.c.l.b16 %v101
    %v150 = vunpack.c.h.b16 %v101
    %v151 = vunpack.c.l.b16 %v102
    %v152 = vunpack.c.h.b16 %v102
    %v153 = vunpack.c.l.b16 %v103
    %v154 = vunpack.c.h.b16 %v103
    %v155 = vunpack.c.l.b16 %v104
    %v156 = vunpack.c.h.b16 %v104
    %v157 = vunpack.c.l.b16 %v105
    %v158 = vunpack.c.h.b16 %v105
    %v159 = vunpack.c.l.b16 %v106
    %v160 = vunpack.c.h.b16 %v106
    %v161 = vpack.c.b16 %v131, %v129
    %v162 = vpack.c.b16 %v132, %v130
    %v163 = vpack.c.b16 %v135, %v133
    %v164 = vpack.c.b16 %v136, %v134
    %v165 = vpack.c.b16 %v139, %v137
    %v166 = vpack.c.b16 %v140, %v138
    %v167 = vpack.c.b16 %v143, %v141
    %v168 = vpack.c.b16 %v144, %v142
    %v169 = vpack.c.b16 %v147, %v145
    %v170 = vpack.c.b16 %v148, %v146
    %v171 = vpack.c.b16 %v151, %v149
    %v172 = vpack.c.b16 %v152, %v150
    %v173 = vpack.c.b16 %v155, %v153
    %v174 = vpack.c.b16 %v156, %v154
    %v175 = vpack.c.b16 %v159, %v157
    %v176 = vpack.c.b16 %v160, %v158
    %193 = vmatpush.bf16.msra.mxu0 %v175
    %194 = vmatpush.bf16.msra.mxu0 %v173
    %195 = vmatpush.bf16.msra.mxu0 %v171
    %196 = vmatpush.bf16.msra.mxu0 %v169
    %197 = vmatpush.bf16.msra.mxu0 %v167
    %198 = vmatpush.bf16.msra.mxu0 %v165
    %199 = vmatpush.bf16.msra.mxu0 %v163
    %200 = vmatpush.bf16.msra.mxu0 %v161
    %201 = vmatmul.bf16.gmra.mxu0 %v90
    %v202 = vpop.f32.mrf.mxu0
    %v203 = vadd.f32 %v109, %v202
    %v204 = vpop.f32.mrf.mxu0
    %v205 = vadd.f32 %v109, %v204
    %206 = vdwg.mxu0
    %207 = vmatpush.bf16.msra.mxu0 %v176
    %208 = vmatpush.bf16.msra.mxu0 %v174
    %209 = vmatpush.bf16.msra.mxu0 %v172
    %210 = vmatpush.bf16.msra.mxu0 %v170
    %211 = vmatpush.bf16.msra.mxu0 %v168
    %212 = vmatpush.bf16.msra.mxu0 %v166
    %213 = vmatpush.bf16.msra.mxu0 %v164
    %214 = vmatpush.bf16.msra.mxu0 %v162
    %215 = vmatmul.bf16.gmra.mxu0 %v90
    %v216 = vpop.f32.mrf.mxu0
    %v217 = vadd.f32 %v110, %v216
    %v218 = vpop.f32.mrf.mxu0
    %v219 = vadd.f32 %v110, %v218
    %220 = vdwg.mxu0
    %v221 = vmax.f32 %v203, 0.0
    %v222 = vmax.f32 %v217, 0.0
    %v223 = vmax.f32 %v205, 0.0
    %v224 = vmax.f32 %v219, 0.0
    %v225 = vld [vmem:[#allocation2] sm:$0xff]
    %v226 = vld [vmem:[#allocation2 + $0x8] sm:$0xff]
    %v227 = vpack.c.bf16 %v223, %v221
    %v228 = vpack.c.bf16 %v224, %v222
    %v229 = vld [vmem:[#allocation9] sm:$0xf]
    %v230 = vld [vmem:[#allocation9 + $0x4] sm:$0xf]
    %v231 = vld [vmem:[#allocation9 + $0x8] sm:$0xf]
    %v232 = vld [vmem:[#allocation9 + $0xc] sm:$0xf]
    %v233 = vld [vmem:[#allocation9 + $0x10] sm:$0xf]
    %v234 = vld [vmem:[#allocation9 + $0x14] sm:$0xf]
    %v235 = vld [vmem:[#allocation9 + $0x18] sm:$0xf]
    %v236 = vld [vmem:[#allocation9 + $0x1c] sm:$0xf]
    %v237 = vld [vmem:[#allocation9 + $0x20] sm:$0xf]
    %v238 = vld [vmem:[#allocation9 + $0x24] sm:$0xf]
    %v239 = vld [vmem:[#allocation9 + $0x28] sm:$0xf]
    %v240 = vld [vmem:[#allocation9 + $0x2c] sm:$0xf]
    %v241 = vld [vmem:[#allocation9 + $0x30] sm:$0xf]
    %v242 = vld [vmem:[#allocation9 + $0x34] sm:$0xf]
    %v243 = vld [vmem:[#allocation9 + $0x38] sm:$0xf]
    %v244 = vld [vmem:[#allocation9 + $0x3c] sm:$0xf]
    %v245 = vld [vmem:[#allocation9 + $0x40] sm:$0xf]
    %v246 = vld [vmem:[#allocation9 + $0x44] sm:$0xf]
    %v247 = vld [vmem:[#allocation9 + $0x48] sm:$0xf]
    %v248 = vld [vmem:[#allocation9 + $0x4c] sm:$0xf]
    %v249 = vld [vmem:[#allocation9 + $0x50] sm:$0xf]
    %v250 = vld [vmem:[#allocation9 + $0x54] sm:$0xf]
    %v251 = vld [vmem:[#allocation9 + $0x58] sm:$0xf]
    %v252 = vld [vmem:[#allocation9 + $0x5c] sm:$0xf]
    %v253 = vld [vmem:[#allocation9 + $0x60] sm:$0xf]
    %v254 = vld [vmem:[#allocation9 + $0x64] sm:$0xf]
    %v255 = vld [vmem:[#allocation9 + $0x68] sm:$0xf]
    %v256 = vld [vmem:[#allocation9 + $0x6c] sm:$0xf]
    %v257 = vld [vmem:[#allocation9 + $0x70] sm:$0xf]
    %v258 = vld [vmem:[#allocation9 + $0x74] sm:$0xf]
    %v259 = vld [vmem:[#allocation9 + $0x78] sm:$0xf]
    %v260 = vld [vmem:[#allocation9 + $0x7c] sm:$0xf]
    %v293 = vunpack.c.l.b16 %v229
    %v294 = vunpack.c.l.b16 %v230
    %v295 = vunpack.c.l.b16 %v231
    %v296 = vunpack.c.l.b16 %v232
    %v297 = vunpack.c.l.b16 %v233
    %v298 = vunpack.c.l.b16 %v234
    %v299 = vunpack.c.l.b16 %v235
    %v300 = vunpack.c.l.b16 %v236
    %v301 = vunpack.c.l.b16 %v237
    %v302 = vunpack.c.l.b16 %v238
    %v303 = vunpack.c.l.b16 %v239
    %v304 = vunpack.c.l.b16 %v240
    %v305 = vunpack.c.l.b16 %v241
    %v306 = vunpack.c.l.b16 %v242
    %v307 = vunpack.c.l.b16 %v243
    %v308 = vunpack.c.l.b16 %v244
    %v309 = vunpack.c.l.b16 %v245
    %v310 = vunpack.c.l.b16 %v246
    %v311 = vunpack.c.l.b16 %v247
    %v312 = vunpack.c.l.b16 %v248
    %v313 = vunpack.c.l.b16 %v249
    %v314 = vunpack.c.l.b16 %v250
    %v315 = vunpack.c.l.b16 %v251
    %v316 = vunpack.c.l.b16 %v252
    %v317 = vunpack.c.l.b16 %v253
    %v318 = vunpack.c.l.b16 %v254
    %v319 = vunpack.c.l.b16 %v255
    %v320 = vunpack.c.l.b16 %v256
    %v321 = vunpack.c.l.b16 %v257
    %v322 = vunpack.c.l.b16 %v258
    %v323 = vunpack.c.l.b16 %v259
    %v324 = vunpack.c.l.b16 %v260
    %v325 = vpack.c.b16 %v294, %v293
    %v326 = vpack.c.b16 %v296, %v295
    %v327 = vpack.c.b16 %v298, %v297
    %v328 = vpack.c.b16 %v300, %v299
    %v329 = vpack.c.b16 %v302, %v301
    %v330 = vpack.c.b16 %v304, %v303
    %v331 = vpack.c.b16 %v306, %v305
    %v332 = vpack.c.b16 %v308, %v307
    %v333 = vpack.c.b16 %v310, %v309
    %v334 = vpack.c.b16 %v312, %v311
    %v335 = vpack.c.b16 %v314, %v313
    %v336 = vpack.c.b16 %v316, %v315
    %v337 = vpack.c.b16 %v318, %v317
    %v338 = vpack.c.b16 %v320, %v319
    %v339 = vpack.c.b16 %v322, %v321
    %v340 = vpack.c.b16 %v324, %v323
    %357 = vmatpush.bf16.msra.mxu0 %v332
    %358 = vmatpush.bf16.msra.mxu0 %v331
    %359 = vmatpush.bf16.msra.mxu0 %v330
    %360 = vmatpush.bf16.msra.mxu0 %v329
    %361 = vmatpush.bf16.msra.mxu0 %v328
    %362 = vmatpush.bf16.msra.mxu0 %v327
    %363 = vmatpush.bf16.msra.mxu0 %v326
    %364 = vmatpush.bf16.msra.mxu0 %v325
    %365 = vmatmul.bf16.gmra.mxu0 %v227
    %v366 = vpop.f32.mrf.mxu0
    %v367 = vadd.f32 0.0, %v366
    %v368 = vpop.f32.mrf.mxu0
    %v369 = vadd.f32 0.0, %v368
    %370 = vdwg.mxu0
    %371 = vmatpush.bf16.msra.mxu0 %v340
    %372 = vmatpush.bf16.msra.mxu0 %v339
    %373 = vmatpush.bf16.msra.mxu0 %v338
    %374 = vmatpush.bf16.msra.mxu0 %v337
    %375 = vmatpush.bf16.msra.mxu0 %v336
    %376 = vmatpush.bf16.msra.mxu0 %v335
    %377 = vmatpush.bf16.msra.mxu0 %v334
    %378 = vmatpush.bf16.msra.mxu0 %v333
    %379 = vmatmul.bf16.gmra.mxu0 %v228
    %v380 = vpop.f32.mrf.mxu0
    %v381 = vadd.f32 %v367, %v380
    %v382 = vpop.f32.mrf.mxu0
    %v383 = vadd.f32 %v369, %v382
    %384 = vdwg.mxu0
    %v385 = vadd.f32 %v225, %v381
    %v386 = vadd.f32 %v226, %v383
    %387 = vst [vmem:[#allocation2] sm:$0xff] %v385
    %388 = vst [vmem:[#allocation2 + $0x8] sm:$0xff] %v386
    // Predicated region
    $region42: #{tpu_custom_call.1} parent=1 // pred_check
      %p389 = pneg %p82
    $region43: #{tpu_custom_call.1} parent=1 // pred_check_branch
      %391 = sbr.rel (%p389) target = $region45
    $region44: #{tpu_custom_call.1} parent=1 // pred_region
      %v392 = vld [vmem:[#allocation2] sm:$0xff]
      %v393 = vld [vmem:[#allocation2 + $0x8] sm:$0xff]
      %v394 = vld [vmem:[%s4] sm:$0x1]
      %v396 = vperm.slane %v394, 0
      %v398 = vadd.f32 %v392, %v396
      %v399 = vadd.f32 %v393, %v396
      %400 = vst [vmem:[#allocation11] sm:$0xff] %v398
      %401 = vst [vmem:[#allocation11 + $0x8] sm:$0xff] %v399
    $region45: #{tpu_custom_call.1} parent=1 // pred_fallthru
      _
    // Predicated region
    $region46: #{tpu_custom_call.1} parent=1 // pred_check
      _
    $region47: #{tpu_custom_call.1} parent=1 // pred_check_branch
      %403 = sbr.rel (0) target = $region49
    $region48: #{tpu_custom_call.1} parent=1 // pred_region
      %405 = vsyncadd [#allocation5], 0
      %s406 = sshll.u32 [#allocation11], 4
      %s407 = int_to_ptr.vmem [resolvable:$true] %s406
      %s408 = sshll.u32 %s5, 4
      %s409 = int_to_ptr.hbm [resolvable:$true] %s408
      %414 = dma.vmem_to_hbm [thread:$0]  %s407, 256, %s409, [#allocation5], 128, 128, 8
    $region49: #{tpu_custom_call.1} parent=1 // pred_fallthru
      _
    // Predicated region
    $region50: #{tpu_custom_call.1} parent=1 // pred_check
      _
    $region51: #{tpu_custom_call.1} parent=1 // pred_check_branch
      %416 = sbr.rel (0) target = $region53
    $region52: #{tpu_custom_call.1} parent=1 // pred_region
      %418 = dma.done [#allocation5], 256
    $region53: #{tpu_custom_call.1} parent=1 // pred_fallthru
      _
    %419 = vsyncpa [#allocation4], 1
    %420 = vsyncpa [#allocation7], 1
    %421 = vsyncpa [#allocation10], 1
    %422 = vsyncpa [#allocation5], 1

</llo_original>
